<compile_context>
chip_gen: v7x
topology: tpu7x:2x2x1
jax: 0.10.0
libtpu: 0.0.40
codegen_flags: <defaults>
</compile_context>

<pallas_src>
import functools

import jax
import jax.numpy as jnp
from jax.experimental import pallas as pl
from jax.experimental.pallas import tpu as pltpu

LANE = 128
_MAX_LANE_WIDTH = 32768      # cap on the flat slab's lane dimension
_NUM_DMA_CHUNKS = 8          # chunked HBM->HBM DMAs overlapped via rotating sems
_SUBLANE_ALIGN = 8           # keep chunk boundaries sublane-aligned


# --------------------------------------------------------------------------
# Shape handling (PyTorch .view() semantics, including a single -1)
# --------------------------------------------------------------------------
def _resolve_shape(total, shape):
    if isinstance(shape, int):
        target = (shape,)
    else:
        target = tuple(shape)
    if target.count(-1) > 1:
        raise ValueError("only one dimension can be inferred (-1)")
    if -1 in target:
        known = 1
        for d in target:
            if d != -1:
                known *= d
        if known == 0 or total % known != 0:
            raise ValueError(
                f"cannot view array of {total} elements as shape {target}")
        target = tuple(total // known if d == -1 else d for d in target)
    prod = 1
    for d in target:
        prod *= d
    if prod != total:
        raise ValueError(
            f"cannot view array of {total} elements as shape {target}")
    return target


def _choose_lane_width(total):
    """Largest divisor of `total` that is a multiple of 128 (capped)."""
    if total <= 0 or total % LANE != 0:
        return None
    max_k = min(_MAX_LANE_WIDTH, total) // LANE
    for k in range(max_k, 0, -1):
        w = k * LANE
        if total % w == 0:
            return w
    return None


def _chunk_bounds(rows, num_chunks=_NUM_DMA_CHUNKS, align=_SUBLANE_ALIGN):
    """Static (start, size) row splits: <= num_chunks chunks, align-rounded."""
    num_chunks = max(1, min(num_chunks, -(-rows // align)))
    per = -(-rows // num_chunks)
    per = -(-per // align) * align
    bounds, r = [], 0
    while r < rows:
        size = min(per, rows - r)
        bounds.append((r, size))
        r += size
    return tuple(bounds)


# --------------------------------------------------------------------------
# Pallas kernel: direct HBM -> HBM DMA copy (no VMEM staging)
# --------------------------------------------------------------------------
def _dma_copy_kernel(x_hbm, o_hbm, sem, *, bounds):
    # Issue all chunked DMAs first (overlapped descriptor issue), then wait.
    copies = []
    for i, (r0, size) in enumerate(bounds):
        cp = pltpu.make_async_copy(
            x_hbm.at[pl.ds(r0, size), :],
            o_hbm.at[pl.ds(r0, size), :],
            sem.at[i],
        )
        cp.start()
        copies.append(cp)
    for cp in copies:
        cp.wait()


def _pallas_hbm_copy(flat2d):
    """Materialized identity copy of a lane-dense (rows, width) slab."""
    rows, width = flat2d.shape
    itemsize = flat2d.dtype.itemsize
    bounds = _chunk_bounds(rows)
    kernel = functools.partial(_dma_copy_kernel, bounds=bounds)
    return pl.pallas_call(
        kernel,
        out_shape=jax.ShapeDtypeStruct((rows, width), flat2d.dtype),
        in_specs=[pl.BlockSpec(memory_space=pl.ANY)],
        out_specs=pl.BlockSpec(memory_space=pl.ANY),
        scratch_shapes=[pltpu.SemaphoreType.DMA((len(bounds),))],
        cost_estimate=pl.CostEstimate(
            flops=0,
            transcendentals=0,
            bytes_accessed=2 * rows * width * itemsize,
        ),
    )(flat2d)


# --------------------------------------------------------------------------
# Forward
# --------------------------------------------------------------------------
def view_forward(x, shape, materialize=False):
    """JAX equivalent of View(shape)(x) == x.view(shape).

    materialize=False (default): metadata-only jnp.reshape — the optimal,
    exact `.view()` semantics (0 bytes moved).
    materialize=True: force a materialized copy through the Pallas HBM->HBM
    DMA kernel (falls back to reshape for 64-bit dtypes or N % 128 != 0).
    """
    total = x.size
    target_shape = _resolve_shape(total, shape)

    if not materialize:
        return jnp.reshape(x, target_shape)

    if x.dtype.itemsize >= 8:  # 64-bit dtypes: not native on TPU -> reshape
        return jnp.reshape(x, target_shape)

    width = _choose_lane_width(total)
    if width is None:
        return jnp.reshape(x, target_shape)

    flat2d = jnp.reshape(x, (total // width, width))     # metadata only
    out2d = _pallas_hbm_copy(flat2d)                     # DMA hot path
    return jnp.reshape(out2d, target_shape)              # metadata only


class View:
    """Mirror of the PyTorch module."""

    def __init__(self, shape):
        self.shape = (shape,)

    def __call__(self, x, materialize=False):
        return view_forward(x, *self.shape, materialize=materialize)


if __name__ == "__main__":
    key = jax.random.PRNGKey(0)

    # 1) Typical autoencoder usage: View((-1, C*H*W)) before a Linear.
    #    Default path = metadata-only reshape (the optimal implementation).
    x = jax.random.normal(key, (2, 4, 16, 16), dtype=jnp.float32)
    mod = View((-1, 4 * 16 * 16))
    y = jax.block_until_ready(mod(x))
    ref = jnp.reshape(x, (2, 1024))
    assert y.shape == (2, 1024) and y.dtype == x.dtype
    assert bool(jnp.all(y == ref))

    # 2) Same input through the Pallas HBM->HBM DMA kernel (materialized).
    y2 = jax.block_until_ready(mod(x, materialize=True))
    assert y2.shape == (2, 1024)
    assert bool(jnp.all(y2 == ref))

    # 3) bf16 activations through the DMA kernel (wide lane-dense slab).
    xb = jax.random.normal(jax.random.PRNGKey(1), (8, 16, 32, 32),
                           dtype=jnp.bfloat16)
    yb = jax.block_until_ready(view_forward(xb, (8, -1), materialize=True))
    assert yb.shape == (8, 16 * 32 * 32)
    assert bool(jnp.all(yb == jnp.reshape(xb, (8, 16384))))

    # 4) Larger f32 slab -> exercises multiple chunked DMAs / rotating sems.
    xc = jax.random.normal(jax.random.PRNGKey(3), (64, 4, 64, 64),
                           dtype=jnp.float32)
    yc = jax.block_until_ready(view_forward(xc, (-1, 4 * 64 * 64),
                                            materialize=True))
    assert yc.shape == (64, 4 * 64 * 64)
    assert bool(jnp.all(yc == jnp.reshape(xc, (64, 4 * 64 * 64))))

    # 5) Element count not a multiple of 128 -> metadata-only fallback.
    xo = jax.random.normal(jax.random.PRNGKey(2), (2, 3, 5, 7),
                           dtype=jnp.float32)
    yo = jax.block_until_ready(view_forward(xo, (-1,), materialize=True))
    assert yo.shape == (210,)
    assert bool(jnp.all(yo == jnp.reshape(xo, (210,))))

    print("KERNEL_OK")
</pallas_src>

<mosaic_0001>
module attributes {stable_mosaic.version = 11 : i64} {
  func.func @_dma_copy_kernel(%arg0: memref<1x2048xf32, #tpu.memory_space<any>>, %arg1: memref<1x2048xf32, #tpu.memory_space<any>>, %arg2: memref<1x!tpu.dma_semaphore, #tpu.memory_space<semaphore_mem>>) attributes {dimension_semantics = [], scalar_prefetch = 0 : i64, scratch_operands = 1 : i64, tpu.core_type = #tpu.core_type<tc>} {
    %c0_i32 = arith.constant 0 : i32
    %c0_i32_0 = arith.constant 0 : i32
    %c0_i32_1 = arith.constant 0 : i32
    %0 = tpu.memref_slice %arg0[%c0_i32_0, %c0_i32_1] : memref<1x2048xf32, #tpu.memory_space<any>> -> memref<1x2048xf32, #tpu.memory_space<any>>
    %c0_i32_2 = arith.constant 0 : i32
    %c0_i32_3 = arith.constant 0 : i32
    %1 = tpu.memref_slice %arg1[%c0_i32_2, %c0_i32_3] : memref<1x2048xf32, #tpu.memory_space<any>> -> memref<1x2048xf32, #tpu.memory_space<any>>
    %2 = tpu.memref_slice %arg2[%c0_i32] : memref<1x!tpu.dma_semaphore, #tpu.memory_space<semaphore_mem>> -> memref<1x!tpu.dma_semaphore, #tpu.memory_space<semaphore_mem>>
    %3 = tpu.memref_squeeze %2 : memref<1x!tpu.dma_semaphore, #tpu.memory_space<semaphore_mem>> -> memref<!tpu.dma_semaphore, #tpu.memory_space<semaphore_mem>>
    tpu.enqueue_dma source(%0 : memref<1x2048xf32, #tpu.memory_space<any>>) target(%1 : memref<1x2048xf32, #tpu.memory_space<any>>) target_semaphore(%3 : memref<!tpu.dma_semaphore, #tpu.memory_space<semaphore_mem>>)
    %c0_i32_4 = arith.constant 0 : i32
    %c0_i32_5 = arith.constant 0 : i32
    %c0_i32_6 = arith.constant 0 : i32
    %4 = tpu.memref_slice %arg0[%c0_i32_5, %c0_i32_6] : memref<1x2048xf32, #tpu.memory_space<any>> -> memref<1x2048xf32, #tpu.memory_space<any>>
    %c0_i32_7 = arith.constant 0 : i32
    %c0_i32_8 = arith.constant 0 : i32
    %5 = tpu.memref_slice %arg1[%c0_i32_7, %c0_i32_8] : memref<1x2048xf32, #tpu.memory_space<any>> -> memref<1x2048xf32, #tpu.memory_space<any>>
    %6 = tpu.memref_slice %arg2[%c0_i32_4] : memref<1x!tpu.dma_semaphore, #tpu.memory_space<semaphore_mem>> -> memref<1x!tpu.dma_semaphore, #tpu.memory_space<semaphore_mem>>
    %7 = tpu.memref_squeeze %6 : memref<1x!tpu.dma_semaphore, #tpu.memory_space<semaphore_mem>> -> memref<!tpu.dma_semaphore, #tpu.memory_space<semaphore_mem>>
    tpu.wait_dma2 semaphore(%7 : memref<!tpu.dma_semaphore, #tpu.memory_space<semaphore_mem>>) src(%4 : memref<1x2048xf32, #tpu.memory_space<any>>) dst(%5 : memref<1x2048xf32, #tpu.memory_space<any>>)
    return
  }
}

</mosaic_0001>

<llo_original>
// kernel: tpu_custom_call.1
$region0: #{tpu_custom_call.1}
  #allocation0 [shape = 'u32[]', space=smem, size = 0x4, offset = 0x4, fixed_abs, tag = 'smem constant byte address 0x4 - core index']
  #allocation1 [shape = 'u32[144,128]{1,0:T(1,128)}', space=vmem, size = 0x12000, scoped, tag = 'internal scratch']
  #allocation2 [shape = 's32[1]{0}', space=sflag, size = 0x4, scoped, tag = 'scratch operand']
  #allocation3 [shape = 's32[]', space=sflag, size = 0x4, offset = 0, fixed_abs, tag = 'sflag constant byte address 0x0 - dummy sync flag']
  #allocation4 [shape = 'u32[0]{0}', space=smem, size = 0, offset = 0, fixed_abs, tag = 'smem constant byte address 0x0 - null']
  %s0 = inlined_call_operand.hbm [shape: f32[1,2048], index: 0, kind: input, shape index: {}]
  %s1 = inlined_call_operand.hbm [shape: f32[1,2048], index: 1, kind: output, shape index: {}]
  %s2 = sld [smem:[#allocation0]]
  $region2: #{tpu_custom_call.1} parent=0
    _
  %s4 = ssub.s32 1, %s2
  %s5 = scalar_select 0, %s4, %s2
  %s7 = sshll.u32 1, 14
  %s8 = sxor.u32 4294967295, %s7
  %s11 = sshll.u32 3, 24
  %s12 = sxor.u32 4294967295, %s11
  %s13 = sand.u32 0, %s12
  %s15 = sor.u32 %s13, 0
  %18 = dma.general %s0, 256, %s1, [#allocation2], [#allocation3], [#allocation4], %s15, 0
  %s19 = smul.u32 1, 16
  %s20 = sshll.u32 %s19, 4
  %21 = dma.done [#allocation2], %s20
  %22 = vsyncmov [#allocation2]
  %s23 = vpop.sfrf %22
  %p24 = scmp.eq.s32.totalorder %s23, 0
  %p25 = pneg %p24
  %27 = shalt.err (%p25)

</llo_original>
